<compile_context>
chip_gen: v6e
topology: v6e:2x2x1
jax: 0.10.0
libtpu: 0.0.40
codegen_flags: <defaults>
</compile_context>

<pallas_src>
import functools

import jax
import jax.numpy as jnp
import numpy as np
from jax.experimental import pallas as pl
from jax.experimental.pallas import tpu as pltpu


# ------------------------------------------------------------------
# Fused Squeeze-and-Excitation kernel
# ------------------------------------------------------------------

def _se_kernel(x_ref, p_ref, o_ref, *, C, Cr, inv_hw):
    """x_ref: [Bt, C, HW].  p_ref: packed params [C + Cr + 2, C] (f32).

    p_ref layout:
      rows [0      : C     , 0:Cr] = fc1 weight, transposed  (w1.T, [C, Cr])
      rows [C      : C+Cr  , 0:C ] = fc2 weight, transposed  (w2.T, [Cr, C])
      row  [C+Cr            , 0:Cr] = fc1 bias
      row  [C+Cr+1          , 0:C ] = fc2 bias
    """
    w1t = p_ref[0:C, 0:Cr]                        # [C, Cr]
    w2t = p_ref[C:C + Cr, 0:C]                    # [Cr, C]
    b1 = p_ref[C + Cr:C + Cr + 1, 0:Cr]           # [1, Cr]
    b2 = p_ref[C + Cr + 1:C + Cr + 2, 0:C]        # [1, C]

    # ---- Squeeze: global average pool over the spatial (lane) axis ----
    # Accumulate in f32 regardless of the storage dtype of x.
    pooled = jnp.sum(x_ref[...].astype(jnp.float32), axis=-1) * inv_hw   # [Bt, C]

    # ---- Excite: conv1x1 -> ReLU -> conv1x1 -> sigmoid (all in VMEM) ----
    z = jnp.dot(pooled, w1t, preferred_element_type=jnp.float32) + b1    # [Bt, Cr]
    z = jnp.maximum(z, 0.0)
    z = jnp.dot(z, w2t, preferred_element_type=jnp.float32) + b2         # [Bt, C]
    gate = jax.nn.sigmoid(z)                                             # [Bt, C]

    # ---- Rescale: re-read x from VMEM (cheap) instead of keeping it live ----
    y = x_ref[...].astype(jnp.float32) * gate[:, :, None]                # [Bt, C, HW]
    o_ref[...] = y.astype(o_ref.dtype)


def squeeze_excitation(x, w1, b1, w2, b2, *, vmem_budget_bytes=24 * 1024 * 1024):
    """x: [B, C, H, W].  w1: [Cr, C], b1: [Cr], w2: [C, Cr], b2: [C]."""
    B, C, H, W = x.shape
    HW = H * W
    Cr = w1.shape[0]

    # x is presented as [B, C, HW]: lane axis HW (multiple of 128 here -> full
    # unmasked vst), sublane axis C (multiple of 8).  Free reshape, no copies.
    x3 = x.reshape(B, C, HW)

    # Pack all fc parameters into one slab -> one DMA instead of four.
    p = jnp.zeros((C + Cr + 2, C), jnp.float32)
    p = p.at[0:C, 0:Cr].set(jnp.asarray(w1, jnp.float32).T)
    p = p.at[C:C + Cr, 0:C].set(jnp.asarray(w2, jnp.float32).T)
    p = p.at[C + Cr, 0:Cr].set(jnp.asarray(b1, jnp.float32))
    p = p.at[C + Cr + 1, 0:C].set(jnp.asarray(b2, jnp.float32))

    # How many batch elements per block: largest divisor of B whose
    # double-buffered (in + out) footprint fits the VMEM budget.
    bytes_per_b = C * HW * x3.dtype.itemsize

    def fits(bt):
        return 2 * 2 * bt * bytes_per_b <= vmem_budget_bytes   # 2 bufs x (in + out)

    bt = 1
    for cand in range(1, B + 1):
        if B % cand == 0 and fits(cand):
            bt = cand
    grid = (B // bt,)

    kernel = functools.partial(_se_kernel, C=C, Cr=Cr, inv_hw=1.0 / float(HW))

    y3 = pl.pallas_call(
        kernel,
        grid=grid,
        out_shape=jax.ShapeDtypeStruct((B, C, HW), x3.dtype),
        in_specs=[
            pl.BlockSpec((bt, C, HW), lambda i: (i, 0, 0)),        # x (Bt batch elems)
            pl.BlockSpec((C + Cr + 2, C), lambda i: (0, 0)),       # packed params
        ],
        out_specs=pl.BlockSpec((bt, C, HW), lambda i: (i, 0, 0)),
        compiler_params=pltpu.CompilerParams(
            dimension_semantics=("parallel",),
            vmem_limit_bytes=48 * 1024 * 1024,
        ),
    )(x3, p)

    return y3.reshape(B, C, H, W)


# ------------------------------------------------------------------
# Pure-JAX reference (for correctness check)
# ------------------------------------------------------------------

def reference_se(x, w1, b1, w2, b2):
    pooled = jnp.mean(x.astype(jnp.float32), axis=(2, 3))    # [B, C]
    z = pooled @ w1.T + b1                                   # [B, Cr]
    z = jnp.maximum(z, 0.0)
    z = z @ w2.T + b2                                        # [B, C]
    gate = jax.nn.sigmoid(z)                                 # [B, C]
    return (x.astype(jnp.float32) * gate[:, :, None, None]).astype(x.dtype)


# ------------------------------------------------------------------
# Main
# ------------------------------------------------------------------

if __name__ == "__main__":
    B, C, H, W = 2, 64, 16, 16
    reduction = 16
    Cr = C // reduction

    key = jax.random.PRNGKey(0)
    kx, kw1, kb1, kw2, kb2 = jax.random.split(key, 5)

    x = jax.random.normal(kx, (B, C, H, W), dtype=jnp.float32)
    # Conv2d(C, Cr, 1).weight is [Cr, C, 1, 1] -> store as [Cr, C]; likewise [C, Cr].
    w1 = (0.1 * jax.random.normal(kw1, (Cr, C))).astype(jnp.float32)
    b1 = (0.05 * jax.random.normal(kb1, (Cr,))).astype(jnp.float32)
    w2 = (0.1 * jax.random.normal(kw2, (C, Cr))).astype(jnp.float32)
    b2 = (0.05 * jax.random.normal(kb2, (C,))).astype(jnp.float32)

    y = squeeze_excitation(x, w1, b1, w2, b2)
    jax.block_until_ready(y)

    y_ref = reference_se(x, w1, b1, w2, b2)
    assert y.shape == (B, C, H, W)
    assert np.allclose(np.asarray(y), np.asarray(y_ref), atol=1e-5, rtol=1e-5), \
        "SE output mismatch"

    print("KERNEL_OK")
</pallas_src>

<mosaic_0001>
module attributes {stable_mosaic.version = 11 : i64} {
  func.func @_se_kernel(%arg0: i32, %arg1: memref<2x64x256xf32, #tpu.memory_space<vmem>>, %arg2: memref<70x64xf32, #tpu.memory_space<vmem>>, %arg3: memref<2x64x256xf32, #tpu.memory_space<vmem>>) attributes {dimension_semantics = [#tpu.dimension_semantics<parallel>], iteration_bounds = array<i64: 1>, scalar_prefetch = 0 : i64, scratch_operands = 0 : i64, tpu.core_type = #tpu.core_type<tc>, window_params = [{transform_indices = @transform_0, window_bounds = array<i64: 2, 64, 256>}, {pipeline_mode = #tpu.pipeline_mode<synchronous>, transform_indices = @transform_1, window_bounds = array<i64: 70, 64>}, {transform_indices = @transform_2, window_bounds = array<i64: 2, 64, 256>}]} {
    %c0 = arith.constant 0 : index
    %c0_0 = arith.constant 0 : index
    %0 = vector.load %arg2[%c0, %c0_0] : memref<70x64xf32, #tpu.memory_space<vmem>>, vector<64x4xf32>
    %c64 = arith.constant 64 : index
    %c0_1 = arith.constant 0 : index
    %1 = vector.load %arg2[%c64, %c0_1] : memref<70x64xf32, #tpu.memory_space<vmem>>, vector<4x64xf32>
    %c68 = arith.constant 68 : index
    %c0_2 = arith.constant 0 : index
    %2 = vector.load %arg2[%c68, %c0_2] : memref<70x64xf32, #tpu.memory_space<vmem>>, vector<1x4xf32>
    %c69 = arith.constant 69 : index
    %c0_3 = arith.constant 0 : index
    %3 = vector.load %arg2[%c69, %c0_3] : memref<70x64xf32, #tpu.memory_space<vmem>>, vector<1x64xf32>
    %c0_4 = arith.constant 0 : index
    %c0_5 = arith.constant 0 : index
    %c0_6 = arith.constant 0 : index
    %4 = vector.load %arg1[%c0_4, %c0_5, %c0_6] : memref<2x64x256xf32, #tpu.memory_space<vmem>>, vector<2x64x256xf32>
    %cst = arith.constant dense<0.000000e+00> : vector<2x64xf32>
    %5 = vector.multi_reduction <add>, %4, %cst [2] : vector<2x64x256xf32> to vector<2x64xf32>
    %cst_7 = arith.constant 3.906250e-03 : f32
    %6 = vector.broadcast %cst_7 : f32 to vector<2x64xf32>
    %7 = arith.mulf %5, %6 : vector<2x64xf32>
    %cst_8 = arith.constant dense<0.000000e+00> : vector<2x4xf32>
    %8 = tpu.matmul %7, %0, %cst_8 {dimension_numbers = #tpu.dot_dimension_numbers<[1], [0], [0], [1], [0, 0, 1, 1], [], []>} : vector<2x64xf32>, vector<64x4xf32>, vector<2x4xf32> -> vector<2x4xf32>
    %9 = vector.broadcast %2 : vector<1x4xf32> to vector<2x4xf32>
    %10 = arith.addf %8, %9 : vector<2x4xf32>
    %cst_9 = arith.constant 0.000000e+00 : f32
    %11 = vector.broadcast %cst_9 : f32 to vector<2x4xf32>
    %12 = arith.maximumf %10, %11 : vector<2x4xf32>
    %cst_10 = arith.constant dense<0.000000e+00> : vector<2x64xf32>
    %13 = tpu.matmul %12, %1, %cst_10 {dimension_numbers = #tpu.dot_dimension_numbers<[1], [0], [0], [1], [0, 0, 1, 1], [], []>} : vector<2x4xf32>, vector<4x64xf32>, vector<2x64xf32> -> vector<2x64xf32>
    %14 = vector.broadcast %3 : vector<1x64xf32> to vector<2x64xf32>
    %15 = arith.addf %13, %14 : vector<2x64xf32>
    %16 = arith.negf %15 : vector<2x64xf32>
    %17 = math.exp %16 : vector<2x64xf32>
    %cst_11 = arith.constant 1.000000e+00 : f32
    %18 = vector.broadcast %cst_11 : f32 to vector<2x64xf32>
    %19 = arith.addf %18, %17 : vector<2x64xf32>
    %20 = arith.divf %18, %19 : vector<2x64xf32>
    %c0_12 = arith.constant 0 : index
    %c0_13 = arith.constant 0 : index
    %c0_14 = arith.constant 0 : index
    %21 = vector.load %arg1[%c0_12, %c0_13, %c0_14] : memref<2x64x256xf32, #tpu.memory_space<vmem>>, vector<2x64x256xf32>
    %22 = vector.shape_cast %20 : vector<2x64xf32> to vector<2x64x1xf32>
    %23 = vector.broadcast %22 : vector<2x64x1xf32> to vector<2x64x256xf32>
    %24 = arith.mulf %21, %23 : vector<2x64x256xf32>
    %c0_15 = arith.constant 0 : index
    %c0_16 = arith.constant 0 : index
    %c0_17 = arith.constant 0 : index
    %25 = vector.load %arg3[%c0_15, %c0_16, %c0_17] : memref<2x64x256xf32, #tpu.memory_space<vmem>>, vector<2x64x256xf32>
    tpu.vector_store %arg3[%c0_15, %c0_16, %c0_17], %24 {strides = array<i32>} : memref<2x64x256xf32, #tpu.memory_space<vmem>>, vector<2x64x256xf32>,
    return
  }
  func.func @transform_0(%arg0: i32) -> (i32, i32, i32) {
    %c0_i32 = arith.constant 0 : i32
    %c0_i32_0 = arith.constant 0 : i32
    %c0_i32_1 = arith.constant 0 : i32
    return %arg0, %c0_i32, %c0_i32_0 : i32, i32, i32
  }
  func.func @transform_1(%arg0: i32) -> (i32, i32) {
    %c0_i32 = arith.constant 0 : i32
    %c0_i32_0 = arith.constant 0 : i32
    %c0_i32_1 = arith.constant 0 : i32
    return %c0_i32, %c0_i32_0 : i32, i32
  }
  func.func @transform_2(%arg0: i32) -> (i32, i32, i32) {
    %c0_i32 = arith.constant 0 : i32
    %c0_i32_0 = arith.constant 0 : i32
    %c0_i32_1 = arith.constant 0 : i32
    return %arg0, %c0_i32, %c0_i32_0 : i32, i32, i32
  }
}

</mosaic_0001>

<llo_original>
// kernel: tpu_custom_call.1
$region0: #{tpu_custom_call.1}
  #allocation0 [shape = 'u32[]', space=smem, size = 0x4, offset = 0x4, fixed_abs, tag = 'smem constant byte address 0x4 - core index']
  #allocation1 [shape = 'u32[144,128]{1,0:T(1,128)}', space=vmem, size = 0x12000, scoped, tag = 'internal scratch']
  %s0 = inlined_call_operand.hbm [shape: f32[2,64,256], index: 0, kind: input, shape index: {}]
  %s1 = inlined_call_operand.vmem [shape: f32[70,64], index: 1, kind: input, shape index: {}]
  %s2 = inlined_call_operand.hbm [shape: f32[2,64,256], index: 2, kind: output, shape index: {}]
  %s3 = sld [smem:[#allocation0]]
  $region22: #{tpu_custom_call.1} parent=0
    _
  %s5 = ssub.s32 1, %s3
  %s6 = scalar_select 0, %s5, %s3
  $region1: #{tpu_custom_call.1} parent=0
    #allocation2 [shape = 'u8[131072]{0}', space=vmem, size = 0x20000, scoped, tag = 'input window, operand 0, single buffered']
    #allocation3 [shape = 's32[1]{0}', space=sflag, size = 0x4, scoped, tag = 'scoped memory for tpu_custom_call.1']
    #allocation4 [shape = 's32[1]{0}', space=sflag, size = 0x4, scoped, tag = 'scoped memory for tpu_custom_call.1']
    #allocation5 [shape = 'u8[131072]{0}', space=vmem, size = 0x20000, scoped, tag = 'output window, operand 0, single buffered']
    %7 = vsyncpa [#allocation3], 0
    %8 = vsyncpa [#allocation4], 0
    // Predicated region
    $region2: #{tpu_custom_call.1} parent=1 // pred_check
      _
    $region3: #{tpu_custom_call.1} parent=1 // pred_check_branch
      %10 = sbr.rel (0) target = $region5
    $region4: #{tpu_custom_call.1} parent=1 // pred_region
      %s12 = ssub.s32 4096, 4096
      %13 = vsyncadd [#allocation3], %s12
      %s14 = sshll.u32 [#allocation2], 4
      %s15 = int_to_ptr.vmem [resolvable:$true] %s14
      %20 = dma.hbm_to_vmem [thread:$0]  %s0, 4096, %s15, [#allocation3], 256, 256, 16
    $region5: #{tpu_custom_call.1} parent=1 // pred_fallthru
      _
    // Predicated region
    $region6: #{tpu_custom_call.1} parent=1 // pred_check
      _
    $region7: #{tpu_custom_call.1} parent=1 // pred_check_branch
      %22 = sbr.rel (0) target = $region9
    $region8: #{tpu_custom_call.1} parent=1 // pred_region
      _
    $region9: #{tpu_custom_call.1} parent=1 // pred_fallthru
      _
    // Predicated region
    $region10: #{tpu_custom_call.1} parent=1 // pred_check
      _
    $region11: #{tpu_custom_call.1} parent=1 // pred_check_branch
      %24 = sbr.rel (0) target = $region13
    $region12: #{tpu_custom_call.1} parent=1 // pred_region
      %25 = dma.done [#allocation3], 4096
    $region13: #{tpu_custom_call.1} parent=1 // pred_fallthru
      _
    %v26 = vld [vmem:[%s1] sm:$0xff]
    %v27 = vld [vmem:[%s1 + $0x8] sm:$0xff]
    %v28 = vld [vmem:[%s1 + $0x10] sm:$0xff]
    %v29 = vld [vmem:[%s1 + $0x18] sm:$0xff]
    %v30 = vld [vmem:[%s1 + $0x20] sm:$0xff]
    %v31 = vld [vmem:[%s1 + $0x28] sm:$0xff]
    %v32 = vld [vmem:[%s1 + $0x30] sm:$0xff]
    %v33 = vld [vmem:[%s1 + $0x38] sm:$0xff]
    %v34 = vld [vmem:[%s1 + $0x40] sm:$0xf]
    %v35 = vld [vmem:[%s1 + $0x44] sm:$0x1]
    %v36 = vld [vmem:[%s1 + $0x45] sm:$0x1]
    %v37 = vld [vmem:[#allocation2] sm:$0xff]
    %v38 = vld [vmem:[#allocation2 + $0x8] sm:$0xff]
    %v39 = vld [vmem:[#allocation2 + $0x10] sm:$0xff]
    %v40 = vld [vmem:[#allocation2 + $0x18] sm:$0xff]
    %v41 = vld [vmem:[#allocation2 + $0x20] sm:$0xff]
    %v42 = vld [vmem:[#allocation2 + $0x28] sm:$0xff]
    %v43 = vld [vmem:[#allocation2 + $0x30] sm:$0xff]
    %v44 = vld [vmem:[#allocation2 + $0x38] sm:$0xff]
    %v45 = vld [vmem:[#allocation2 + $0x40] sm:$0xff]
    %v46 = vld [vmem:[#allocation2 + $0x48] sm:$0xff]
    %v47 = vld [vmem:[#allocation2 + $0x50] sm:$0xff]
    %v48 = vld [vmem:[#allocation2 + $0x58] sm:$0xff]
    %v49 = vld [vmem:[#allocation2 + $0x60] sm:$0xff]
    %v50 = vld [vmem:[#allocation2 + $0x68] sm:$0xff]
    %v51 = vld [vmem:[#allocation2 + $0x70] sm:$0xff]
    %v52 = vld [vmem:[#allocation2 + $0x78] sm:$0xff]
    %v53 = vld [vmem:[#allocation2 + $0x80] sm:$0xff]
    %v54 = vld [vmem:[#allocation2 + $0x88] sm:$0xff]
    %v55 = vld [vmem:[#allocation2 + $0x90] sm:$0xff]
    %v56 = vld [vmem:[#allocation2 + $0x98] sm:$0xff]
    %v57 = vld [vmem:[#allocation2 + $0xa0] sm:$0xff]
    %v58 = vld [vmem:[#allocation2 + $0xa8] sm:$0xff]
    %v59 = vld [vmem:[#allocation2 + $0xb0] sm:$0xff]
    %v60 = vld [vmem:[#allocation2 + $0xb8] sm:$0xff]
    %v61 = vld [vmem:[#allocation2 + $0xc0] sm:$0xff]
    %v62 = vld [vmem:[#allocation2 + $0xc8] sm:$0xff]
    %v63 = vld [vmem:[#allocation2 + $0xd0] sm:$0xff]
    %v64 = vld [vmem:[#allocation2 + $0xd8] sm:$0xff]
    %v65 = vld [vmem:[#allocation2 + $0xe0] sm:$0xff]
    %v66 = vld [vmem:[#allocation2 + $0xe8] sm:$0xff]
    %v67 = vld [vmem:[#allocation2 + $0xf0] sm:$0xff]
    %v68 = vld [vmem:[#allocation2 + $0xf8] sm:$0xff]
    %v69 = vadd.f32 %v37, %v38
    %70 = vadd.xlane.f32.xlu0 %v69
    %v71 = vpop.xlane.xlu0 %70
    %v72 = vadd.f32 %v39, %v40
    %73 = vadd.xlane.f32.xlu0 %v72
    %v74 = vpop.xlane.xlu0 %73
    %v75 = vadd.f32 %v41, %v42
    %76 = vadd.xlane.f32.xlu0 %v75
    %v77 = vpop.xlane.xlu0 %76
    %v78 = vadd.f32 %v43, %v44
    %79 = vadd.xlane.f32.xlu0 %v78
    %v80 = vpop.xlane.xlu0 %79
    %v81 = vadd.f32 %v45, %v46
    %82 = vadd.xlane.f32.xlu0 %v81
    %v83 = vpop.xlane.xlu0 %82
    %v84 = vadd.f32 %v47, %v48
    %85 = vadd.xlane.f32.xlu0 %v84
    %v86 = vpop.xlane.xlu0 %85
    %v87 = vadd.f32 %v49, %v50
    %88 = vadd.xlane.f32.xlu0 %v87
    %v89 = vpop.xlane.xlu0 %88
    %v90 = vadd.f32 %v51, %v52
    %91 = vadd.xlane.f32.xlu0 %v90
    %v92 = vpop.xlane.xlu0 %91
    %v93 = vadd.f32 %v53, %v54
    %94 = vadd.xlane.f32.xlu0 %v93
    %v95 = vpop.xlane.xlu0 %94
    %v96 = vadd.f32 %v55, %v56
    %97 = vadd.xlane.f32.xlu0 %v96
    %v98 = vpop.xlane.xlu0 %97
    %v99 = vadd.f32 %v57, %v58
    %100 = vadd.xlane.f32.xlu0 %v99
    %v101 = vpop.xlane.xlu0 %100
    %v102 = vadd.f32 %v59, %v60
    %103 = vadd.xlane.f32.xlu0 %v102
    %v104 = vpop.xlane.xlu0 %103
    %v105 = vadd.f32 %v61, %v62
    %106 = vadd.xlane.f32.xlu0 %v105
    %v107 = vpop.xlane.xlu0 %106
    %v108 = vadd.f32 %v63, %v64
    %109 = vadd.xlane.f32.xlu0 %v108
    %v110 = vpop.xlane.xlu0 %109
    %v111 = vadd.f32 %v65, %v66
    %112 = vadd.xlane.f32.xlu0 %v111
    %v113 = vpop.xlane.xlu0 %112
    %v114 = vadd.f32 %v67, %v68
    %115 = vadd.xlane.f32.xlu0 %v114
    %v116 = vpop.xlane.xlu0 %115
    %v117 = vmul.f32 %v71, 0.00390625
    %v118 = vmul.f32 %v74, 0.00390625
    %v119 = vmul.f32 %v77, 0.00390625
    %v120 = vmul.f32 %v80, 0.00390625
    %v121 = vmul.f32 %v83, 0.00390625
    %v122 = vmul.f32 %v86, 0.00390625
    %v123 = vmul.f32 %v89, 0.00390625
    %v124 = vmul.f32 %v92, 0.00390625
    %v125 = vmul.f32 %v95, 0.00390625
    %v126 = vmul.f32 %v98, 0.00390625
    %v127 = vmul.f32 %v101, 0.00390625
    %v128 = vmul.f32 %v104, 0.00390625
    %v129 = vmul.f32 %v107, 0.00390625
    %v130 = vmul.f32 %v110, 0.00390625
    %v131 = vmul.f32 %v113, 0.00390625
    %v132 = vmul.f32 %v116, 0.00390625
    %v133 = vlaneseq
    %v134 = vshrl.u32 %v133, 7
    %v135 = vsub.s32 0, %v134
    %v136 = vrot.slane %v35, %v135
    %v153 = vlaneseq
    %v154 = vand.u32 %v153, 127
    %v155 = vlaneseq
    %v156 = vshrl.u32 %v155, 7
    %v157 = vsub.s32 %v154, %v156
    %v158 = vrot.slane %v117, %v157
    %v159 = vadd.s32 %v154, 4294967288
    %v160 = vlaneseq
    %v161 = vshrl.u32 %v160, 7
    %v162 = vsub.s32 %v159, %v161
    %v163 = vrot.slane %v118, %v162
    %vm164 = vcmask 130112
    %v165 = vsel %vm164, %v163, %v158
    %v166 = vadd.s32 %v154, 4294967280
    %v167 = vlaneseq
    %v168 = vshrl.u32 %v167, 7
    %v169 = vsub.s32 %v166, %v168
    %v170 = vrot.slane %v119, %v169
    %vm171 = vcmask 195712
    %v172 = vsel %vm171, %v170, %v165
    %v173 = vadd.s32 %v154, 4294967272
    %v174 = vlaneseq
    %v175 = vshrl.u32 %v174, 7
    %v176 = vsub.s32 %v173, %v175
    %v177 = vrot.slane %v120, %v176
    %vm178 = vcmask 261312
    %v179 = vsel %vm178, %v177, %v172
    %v180 = vadd.s32 %v154, 4294967264
    %v181 = vlaneseq
    %v182 = vshrl.u32 %v181, 7
    %v183 = vsub.s32 %v180, %v182
    %v184 = vrot.slane %v121, %v183
    %vm185 = vcmask 326912
    %v186 = vsel %vm185, %v184, %v179
    %v187 = vadd.s32 %v154, 4294967256
    %v188 = vlaneseq
    %v189 = vshrl.u32 %v188, 7
    %v190 = vsub.s32 %v187, %v189
    %v191 = vrot.slane %v122, %v190
    %vm192 = vcmask 392512
    %v193 = vsel %vm192, %v191, %v186
    %v194 = vadd.s32 %v154, 4294967248
    %v195 = vlaneseq
    %v196 = vshrl.u32 %v195, 7
    %v197 = vsub.s32 %v194, %v196
    %v198 = vrot.slane %v123, %v197
    %vm199 = vcmask 458112
    %v200 = vsel %vm199, %v198, %v193
    %v201 = vadd.s32 %v154, 4294967240
    %v202 = vlaneseq
    %v203 = vshrl.u32 %v202, 7
    %v204 = vsub.s32 %v201, %v203
    %v205 = vrot.slane %v124, %v204
    %vm206 = vcmask 523712
    %v207 = vsel %vm206, %v205, %v200
    %v208 = vlaneseq
    %v209 = vshrl.u32 %v208, 7
    %v210 = vsub.s32 %v154, %v209
    %v211 = vrot.slane %v125, %v210
    %v212 = vlaneseq
    %v213 = vshrl.u32 %v212, 7
    %v214 = vsub.s32 %v159, %v213
    %v215 = vrot.slane %v126, %v214
    %v216 = vsel %vm164, %v215, %v211
    %v217 = vlaneseq
    %v218 = vshrl.u32 %v217, 7
    %v219 = vsub.s32 %v166, %v218
    %v220 = vrot.slane %v127, %v219
    %v221 = vsel %vm171, %v220, %v216
    %v222 = vlaneseq
    %v223 = vshrl.u32 %v222, 7
    %v224 = vsub.s32 %v173, %v223
    %v225 = vrot.slane %v128, %v224
    %v226 = vsel %vm178, %v225, %v221
    %v227 = vlaneseq
    %v228 = vshrl.u32 %v227, 7
    %v229 = vsub.s32 %v180, %v228
    %v230 = vrot.slane %v129, %v229
    %v231 = vsel %vm185, %v230, %v226
    %v232 = vlaneseq
    %v233 = vshrl.u32 %v232, 7
    %v234 = vsub.s32 %v187, %v233
    %v235 = vrot.slane %v130, %v234
    %v236 = vsel %vm192, %v235, %v231
    %v237 = vlaneseq
    %v238 = vshrl.u32 %v237, 7
    %v239 = vsub.s32 %v194, %v238
    %v240 = vrot.slane %v131, %v239
    %v241 = vsel %vm199, %v240, %v236
    %v242 = vlaneseq
    %v243 = vshrl.u32 %v242, 7
    %v244 = vsub.s32 %v201, %v243
    %v245 = vrot.slane %v132, %v244
    %v246 = vsel %vm206, %v245, %v241
    %vm247 = vcmask 1041409
    %v248 = vsel %vm247, %v246, %v207
    %vm249 = vcmask 523264
    %v250 = vsel %vm249, %v248, 0
    %252 = vmatprep.subr.mxu0 0.0
    %253 = vmatpush1.msra.mxu0 0.0
    %254 = vmatprep.subr.mxu0 0.0
    %255 = vmatpush1.msra.mxu0 0.0
    %256 = vmatprep.subr.mxu0 0.0
    %257 = vmatpush1.msra.mxu0 0.0
    %258 = vmatprep.subr.mxu0 0.0
    %259 = vmatpush1.msra.mxu0 0.0
    %260 = vmatprep.subr.mxu0 0.0
    %261 = vmatpush1.msra.mxu0 0.0
    %262 = vmatprep.subr.mxu0 0.0
    %263 = vmatpush1.msra.mxu0 0.0
    %264 = vmatprep.subr.mxu0 0.0
    %265 = vmatpush1.msra.mxu0 0.0
    %266 = vmatprep.subr.mxu0 0.0
    %267 = vmatpush1.msra.mxu0 0.0
    %268 = vmatprep.subr.mxu0 0.0
    %269 = vmatpush1.msra.mxu0 %v33
    %270 = vmatprep.subr.mxu0 0.0
    %271 = vmatpush1.msra.mxu0 %v32
    %272 = vmatprep.subr.mxu0 0.0
    %273 = vmatpush1.msra.mxu0 %v31
    %274 = vmatprep.subr.mxu0 0.0
    %275 = vmatpush1.msra.mxu0 %v30
    %276 = vmatprep.subr.mxu0 0.0
    %277 = vmatpush1.msra.mxu0 %v29
    %278 = vmatprep.subr.mxu0 0.0
    %279 = vmatpush1.msra.mxu0 %v28
    %280 = vmatprep.subr.mxu0 0.0
    %281 = vmatpush1.msra.mxu0 %v27
    %282 = vmatprep.subr.mxu0 0.0
    %283 = vmatpush1.msra.mxu0 %v26
    %284 = vmatprep.subr.mxu0 0.0
    %285 = vmatpush2.msra.mxu0 0.0
    %286 = vmatprep.subr.mxu0 0.0
    %287 = vmatpush2.msra.mxu0 0.0
    %288 = vmatprep.subr.mxu0 0.0
    %289 = vmatpush2.msra.mxu0 0.0
    %290 = vmatprep.subr.mxu0 0.0
    %291 = vmatpush2.msra.mxu0 0.0
    %292 = vmatprep.subr.mxu0 0.0
    %293 = vmatpush2.msra.mxu0 0.0
    %294 = vmatprep.subr.mxu0 0.0
    %295 = vmatpush2.msra.mxu0 0.0
    %296 = vmatprep.subr.mxu0 0.0
    %297 = vmatpush2.msra.mxu0 0.0
    %298 = vmatprep.subr.mxu0 0.0
    %299 = vmatpush2.msra.mxu0 0.0
    %300 = vmatprep.subr.mxu0 0.0
    %301 = vmatpush2.msra.mxu0 0.0
    %302 = vmatprep.subr.mxu0 0.0
    %303 = vmatpush2.msra.mxu0 0.0
    %304 = vmatprep.subr.mxu0 0.0
    %305 = vmatpush2.msra.mxu0 0.0
    %306 = vmatprep.subr.mxu0 0.0
    %307 = vmatpush2.msra.mxu0 0.0
    %308 = vmatprep.subr.mxu0 0.0
    %309 = vmatpush2.msra.mxu0 0.0
    %310 = vmatprep.subr.mxu0 0.0
    %311 = vmatpush2.msra.mxu0 0.0
    %312 = vmatprep.subr.mxu0 0.0
    %313 = vmatpush2.msra.mxu0 0.0
    %314 = vmatprep.subr.mxu0 0.0
    %315 = vmatpush2.msra.mxu0 0.0
    %316 = vmatprep.mubr.f32.mxu0 0.0
    %317 = vmatmul.mubr.f32.gmra.mxu0 %v250
    %v318 = vpop.f32.mrf.mxu0
    %v319 = vadd.f32 %v136, %v318
    %v320 = vpop.f32.mrf.mxu0
    %321 = vdwg.mxu0
    %v322 = vmax.f32 %v319, 0.0
    %v323 = vlaneseq
    %v324 = vshrl.u32 %v323, 7
    %v325 = vsub.s32 0, %v324
    %v326 = vrot.slane %v36, %v325
    %vm327 = vcmask 31744
    %v329 = vsel %vm327, %v322, 0
    %vm331 = vcmask 1043456
    %v333 = vsel %vm331, %v34, 0
    %335 = vmatprep.subr.mxu0 0.0
    %336 = vmatpush1.msra.mxu0 0.0
    %337 = vmatprep.subr.mxu0 0.0
    %338 = vmatpush1.msra.mxu0 0.0
    %339 = vmatprep.subr.mxu0 0.0
    %340 = vmatpush1.msra.mxu0 0.0
    %341 = vmatprep.subr.mxu0 0.0
    %342 = vmatpush1.msra.mxu0 0.0
    %343 = vmatprep.subr.mxu0 0.0
    %344 = vmatpush1.msra.mxu0 0.0
    %345 = vmatprep.subr.mxu0 0.0
    %346 = vmatpush1.msra.mxu0 0.0
    %347 = vmatprep.subr.mxu0 0.0
    %348 = vmatpush1.msra.mxu0 0.0
    %349 = vmatprep.subr.mxu0 0.0
    %350 = vmatpush1.msra.mxu0 0.0
    %351 = vmatprep.subr.mxu0 0.0
    %352 = vmatpush1.msra.mxu0 0.0
    %353 = vmatprep.subr.mxu0 0.0
    %354 = vmatpush1.msra.mxu0 0.0
    %355 = vmatprep.subr.mxu0 0.0
    %356 = vmatpush1.msra.mxu0 0.0
    %357 = vmatprep.subr.mxu0 0.0
    %358 = vmatpush1.msra.mxu0 0.0
    %359 = vmatprep.subr.mxu0 0.0
    %360 = vmatpush1.msra.mxu0 0.0
    %361 = vmatprep.subr.mxu0 0.0
    %362 = vmatpush1.msra.mxu0 0.0
    %363 = vmatprep.subr.mxu0 0.0
    %364 = vmatpush1.msra.mxu0 0.0
    %365 = vmatprep.subr.mxu0 0.0
    %366 = vmatpush1.msra.mxu0 %v333
    %367 = vmatprep.subr.mxu0 0.0
    %368 = vmatpush2.msra.mxu0 0.0
    %369 = vmatprep.subr.mxu0 0.0
    %370 = vmatpush2.msra.mxu0 0.0
    %371 = vmatprep.subr.mxu0 0.0
    %372 = vmatpush2.msra.mxu0 0.0
    %373 = vmatprep.subr.mxu0 0.0
    %374 = vmatpush2.msra.mxu0 0.0
    %375 = vmatprep.subr.mxu0 0.0
    %376 = vmatpush2.msra.mxu0 0.0
    %377 = vmatprep.subr.mxu0 0.0
    %378 = vmatpush2.msra.mxu0 0.0
    %379 = vmatprep.subr.mxu0 0.0
    %380 = vmatpush2.msra.mxu0 0.0
    %381 = vmatprep.subr.mxu0 0.0
    %382 = vmatpush2.msra.mxu0 0.0
    %383 = vmatprep.subr.mxu0 0.0
    %384 = vmatpush2.msra.mxu0 0.0
    %385 = vmatprep.subr.mxu0 0.0
    %386 = vmatpush2.msra.mxu0 0.0
    %387 = vmatprep.subr.mxu0 0.0
    %388 = vmatpush2.msra.mxu0 0.0
    %389 = vmatprep.subr.mxu0 0.0
    %390 = vmatpush2.msra.mxu0 0.0
    %391 = vmatprep.subr.mxu0 0.0
    %392 = vmatpush2.msra.mxu0 0.0
    %393 = vmatprep.subr.mxu0 0.0
    %394 = vmatpush2.msra.mxu0 0.0
    %395 = vmatprep.subr.mxu0 0.0
    %396 = vmatpush2.msra.mxu0 0.0
    %397 = vmatprep.subr.mxu0 0.0
    %398 = vmatpush2.msra.mxu0 0.0
    %399 = vmatprep.mubr.f32.mxu0 0.0
    %400 = vmatmul.mubr.f32.gmra.mxu0 %v329
    %v401 = vpop.f32.mrf.mxu0
    %v402 = vadd.f32 %v326, %v401
    %v403 = vpop.f32.mrf.mxu0
    %404 = vdwg.mxu0
    %v405 = vxor.u32 %v402, 2147483648
    %v406 = vmul.f32 %v405, 1.442695
    %v407 = vpow.pop %v406
    %v408 = vadd.f32 %v407, 1.0
    %v409 = vrcp.pop %v408
    %v410 = vmul.f32 1.0, %v409
    %v411 = vlaneseq
    %v412 = vshrl.u32 %v411, 7
    %v413 = vsub.s32 0, %v412
    %v414 = vrot.slane %v410, %v413
    %416 = vbcast.lane.b32.xlu0 %v414, 256
    %v417 = vpop.permute.xlu0 %416
    %s419 = sor.u32 256, 8
    %420 = vbcast.lane.b32.xlu0 %v414, %s419
    %v421 = vpop.permute.xlu0 %420
    %s423 = sor.u32 256, 16
    %424 = vbcast.lane.b32.xlu0 %v414, %s423
    %v425 = vpop.permute.xlu0 %424
    %s427 = sor.u32 256, 24
    %428 = vbcast.lane.b32.xlu0 %v414, %s427
    %v429 = vpop.permute.xlu0 %428
    %s431 = sor.u32 256, 32
    %432 = vbcast.lane.b32.xlu0 %v414, %s431
    %v433 = vpop.permute.xlu0 %432
    %s435 = sor.u32 256, 40
    %436 = vbcast.lane.b32.xlu0 %v414, %s435
    %v437 = vpop.permute.xlu0 %436
    %s439 = sor.u32 256, 48
    %440 = vbcast.lane.b32.xlu0 %v414, %s439
    %v441 = vpop.permute.xlu0 %440
    %s443 = sor.u32 256, 56
    %444 = vbcast.lane.b32.xlu0 %v414, %s443
    %v445 = vpop.permute.xlu0 %444
    %v446 = vlaneseq
    %v447 = vshrl.u32 %v446, 7
    %v448 = vsub.s32 1, %v447
    %v449 = vrot.slane %v410, %v448
    %451 = vbcast.lane.b32.xlu0 %v449, 256
    %v452 = vpop.permute.xlu0 %451
    %s454 = sor.u32 256, 8
    %455 = vbcast.lane.b32.xlu0 %v449, %s454
    %v456 = vpop.permute.xlu0 %455
    %s458 = sor.u32 256, 16
    %459 = vbcast.lane.b32.xlu0 %v449, %s458
    %v460 = vpop.permute.xlu0 %459
    %s462 = sor.u32 256, 24
    %463 = vbcast.lane.b32.xlu0 %v449, %s462
    %v464 = vpop.permute.xlu0 %463
    %s466 = sor.u32 256, 32
    %467 = vbcast.lane.b32.xlu0 %v449, %s466
    %v468 = vpop.permute.xlu0 %467
    %s470 = sor.u32 256, 40
    %471 = vbcast.lane.b32.xlu0 %v449, %s470
    %v472 = vpop.permute.xlu0 %471
    %s474 = sor.u32 256, 48
    %475 = vbcast.lane.b32.xlu0 %v449, %s474
    %v476 = vpop.permute.xlu0 %475
    %s478 = sor.u32 256, 56
    %479 = vbcast.lane.b32.xlu0 %v449, %s478
    %v480 = vpop.permute.xlu0 %479
    %v481 = vmul.f32 %v37, %v417
    %v482 = vmul.f32 %v38, %v417
    %v483 = vmul.f32 %v39, %v421
    %v484 = vmul.f32 %v40, %v421
    %v485 = vmul.f32 %v41, %v425
    %v486 = vmul.f32 %v42, %v425
    %v487 = vmul.f32 %v43, %v429
    %v488 = vmul.f32 %v44, %v429
    %v489 = vmul.f32 %v45, %v433
    %v490 = vmul.f32 %v46, %v433
    %v491 = vmul.f32 %v47, %v437
    %v492 = vmul.f32 %v48, %v437
    %v493 = vmul.f32 %v49, %v441
    %v494 = vmul.f32 %v50, %v441
    %v495 = vmul.f32 %v51, %v445
    %v496 = vmul.f32 %v52, %v445
    %v497 = vmul.f32 %v53, %v452
    %v498 = vmul.f32 %v54, %v452
    %v499 = vmul.f32 %v55, %v456
    %v500 = vmul.f32 %v56, %v456
    %v501 = vmul.f32 %v57, %v460
    %v502 = vmul.f32 %v58, %v460
    %v503 = vmul.f32 %v59, %v464
    %v504 = vmul.f32 %v60, %v464
    %v505 = vmul.f32 %v61, %v468
    %v506 = vmul.f32 %v62, %v468
    %v507 = vmul.f32 %v63, %v472
    %v508 = vmul.f32 %v64, %v472
    %v509 = vmul.f32 %v65, %v476
    %v510 = vmul.f32 %v66, %v476
    %v511 = vmul.f32 %v67, %v480
    %v512 = vmul.f32 %v68, %v480
    %513 = vst [vmem:[#allocation5] sm:$0xff] %v481
    %514 = vst [vmem:[#allocation5 + $0x8] sm:$0xff] %v482
    %515 = vst [vmem:[#allocation5 + $0x10] sm:$0xff] %v483
    %516 = vst [vmem:[#allocation5 + $0x18] sm:$0xff] %v484
    %517 = vst [vmem:[#allocation5 + $0x20] sm:$0xff] %v485
    %518 = vst [vmem:[#allocation5 + $0x28] sm:$0xff] %v486
    %519 = vst [vmem:[#allocation5 + $0x30] sm:$0xff] %v487
    %520 = vst [vmem:[#allocation5 + $0x38] sm:$0xff] %v488
    %521 = vst [vmem:[#allocation5 + $0x40] sm:$0xff] %v489
    %522 = vst [vmem:[#allocation5 + $0x48] sm:$0xff] %v490
    %523 = vst [vmem:[#allocation5 + $0x50] sm:$0xff] %v491
    %524 = vst [vmem:[#allocation5 + $0x58] sm:$0xff] %v492
    %525 = vst [vmem:[#allocation5 + $0x60] sm:$0xff] %v493
    %526 = vst [vmem:[#allocation5 + $0x68] sm:$0xff] %v494
    %527 = vst [vmem:[#allocation5 + $0x70] sm:$0xff] %v495
    %528 = vst [vmem:[#allocation5 + $0x78] sm:$0xff] %v496
    %529 = vst [vmem:[#allocation5 + $0x80] sm:$0xff] %v497
    %530 = vst [vmem:[#allocation5 + $0x88] sm:$0xff] %v498
    %531 = vst [vmem:[#allocation5 + $0x90] sm:$0xff] %v499
    %532 = vst [vmem:[#allocation5 + $0x98] sm:$0xff] %v500
    %533 = vst [vmem:[#allocation5 + $0xa0] sm:$0xff] %v501
    %534 = vst [vmem:[#allocation5 + $0xa8] sm:$0xff] %v502
    %535 = vst [vmem:[#allocation5 + $0xb0] sm:$0xff] %v503
    %536 = vst [vmem:[#allocation5 + $0xb8] sm:$0xff] %v504
    %537 = vst [vmem:[#allocation5 + $0xc0] sm:$0xff] %v505
    %538 = vst [vmem:[#allocation5 + $0xc8] sm:$0xff] %v506
    %539 = vst [vmem:[#allocation5 + $0xd0] sm:$0xff] %v507
    %540 = vst [vmem:[#allocation5 + $0xd8] sm:$0xff] %v508
    %541 = vst [vmem:[#allocation5 + $0xe0] sm:$0xff] %v509
    %542 = vst [vmem:[#allocation5 + $0xe8] sm:$0xff] %v510
    %543 = vst [vmem:[#allocation5 + $0xf0] sm:$0xff] %v511
    %544 = vst [vmem:[#allocation5 + $0xf8] sm:$0xff] %v512
    // Predicated region
    $region14: #{tpu_custom_call.1} parent=1 // pred_check
      _
    $region15: #{tpu_custom_call.1} parent=1 // pred_check_branch
      %546 = sbr.rel (0) target = $region17
    $region16: #{tpu_custom_call.1} parent=1 // pred_region
      %s548 = ssub.s32 4096, 4096
      %549 = vsyncadd [#allocation4], %s548
      %s550 = sshll.u32 [#allocation5], 4
      %s551 = int_to_ptr.vmem [resolvable:$true] %s550
      %556 = dma.vmem_to_hbm [thread:$0]  %s551, 4096, %s2, [#allocation4], 256, 256, 16
    $region17: #{tpu_custom_call.1} parent=1 // pred_fallthru
      _
    // Predicated region
    $region18: #{tpu_custom_call.1} parent=1 // pred_check
      _
    $region19: #{tpu_custom_call.1} parent=1 // pred_check_branch
      %558 = sbr.rel (0) target = $region21
    $region20: #{tpu_custom_call.1} parent=1 // pred_region
      %559 = dma.done [#allocation4], 4096
    $region21: #{tpu_custom_call.1} parent=1 // pred_fallthru
      _
    %560 = vsyncpa [#allocation3], 1
    %561 = vsyncpa [#allocation4], 1

</llo_original>
